<compile_context>
chip_gen: v5e
topology: v5e:2x2
jax: 0.10.0
libtpu: 0.0.40
codegen_flags: <defaults>
</compile_context>

<pallas_src>
import functools

import numpy as np
import jax
import jax.numpy as jnp
from jax.experimental import pallas as pl
from jax.experimental.pallas import tpu as pltpu


def _round_up(x, m):
    return (x + m - 1) // m * m


def shaking_pair_indices(seq_len, visual_field):
    """Static (start, end) index lists matching HandshakingKernel iteration order."""
    starts, ends = [], []
    for i in range(seq_len):
        for j in range(i, min(i + visual_field, seq_len)):
            starts.append(i)
            ends.append(j)
    return np.asarray(starts, np.int32), np.asarray(ends, np.int32)


def _handshaking_fc_kernel(cur_ref, tail_ref, w_top_ref, w_bot_ref, b_cat_ref,
                           w_fc_ref, b_fc_ref, out_ref, *, v_eff, n_out,
                           out_lanes):
    """Per (batch, row-tile) step: all <=V handshaking pairs + fc head.

    cur_ref : (ROWS, Hp)  bf16  rows [i0, i0+ROWS)
    tail_ref: (VPAD, Hp)  bf16  rows [i0+ROWS, i0+ROWS+VPAD)   (window tail)
    out_ref : (ROWS, OUT_LANES) bf16; lanes [n_out*d, n_out*(d+1)) hold the
              logits of pair (i, i+d).
    """
    cur = cur_ref[...]
    tail = tail_ref[...]
    rows = cur.shape[0]

    # [h_i ; h_j] @ W_cat  ==  h_i @ W_top + h_j @ W_bot  (exact, by linearity).
    # The W_bot product of every window row is computed once and re-used for
    # every end offset d via a static-offset slice of the f32 partial.
    ps = jnp.dot(cur, w_top_ref[...], preferred_element_type=jnp.float32)
    pe_cur = jnp.dot(cur, w_bot_ref[...], preferred_element_type=jnp.float32)
    pe_tail = jnp.dot(tail, w_bot_ref[...], preferred_element_type=jnp.float32)
    pe = jnp.concatenate([pe_cur, pe_tail], axis=0)          # (ROWS+VPAD, Hp) f32

    bias = b_cat_ref[...]                                    # (1, Hp)   f32
    w_fc = w_fc_ref[...]                                     # (Hp, 128) bf16
    b_fc = b_fc_ref[...]                                     # (1, 128)  f32

    pieces = []
    for d in range(v_eff):                                   # static unroll
        shaking = jnp.tanh(ps + pe[d:d + rows, :] + bias)    # f32 epilogue
        logits = jnp.dot(shaking.astype(jnp.bfloat16), w_fc,
                         preferred_element_type=jnp.float32) + b_fc
        pieces.append(logits[:, :n_out])                     # (ROWS, n_out)
    used = n_out * v_eff
    if used < out_lanes:
        pieces.append(jnp.zeros((rows, out_lanes - used), jnp.float32))
    out_ref[...] = jnp.concatenate(pieces, axis=-1).astype(out_ref.dtype)


def handshaking_and_fc(seq_p, w_top, w_bot, b_cat_p, w_fc_p, b_fc_p, *,
                       v_eff, n_out, rows, vpad, n_tiles, out_lanes):
    """seq_p: (B, Sp, Hp) bf16, Sp = (n_tiles+1)*rows, zero padded."""
    B, Sp, Hp = seq_p.shape
    assert Sp % rows == 0 and rows % vpad == 0 and Hp % 128 == 0

    kernel = functools.partial(_handshaking_fc_kernel, v_eff=v_eff,
                               n_out=n_out, out_lanes=out_lanes)
    return pl.pallas_call(
        kernel,
        out_shape=jax.ShapeDtypeStruct((B, n_tiles * rows, out_lanes),
                                       jnp.bfloat16),
        grid=(B, n_tiles),
        in_specs=[
            # current row tile and the small window-tail block (same array)
            pl.BlockSpec((None, rows, Hp), lambda b, t: (b, t, 0)),
            pl.BlockSpec((None, vpad, Hp),
                         lambda b, t: (b, (t + 1) * (rows // vpad), 0)),
            # weights / biases: constant index maps -> VMEM resident
            pl.BlockSpec((Hp, Hp), lambda b, t: (0, 0)),      # W_top (bf16)
            pl.BlockSpec((Hp, Hp), lambda b, t: (0, 0)),      # W_bot (bf16)
            pl.BlockSpec((1, Hp), lambda b, t: (0, 0)),       # b_cat (f32)
            pl.BlockSpec((Hp, 128), lambda b, t: (0, 0)),     # W_fc  (bf16)
            pl.BlockSpec((1, 128), lambda b, t: (0, 0)),      # b_fc  (f32)
        ],
        out_specs=pl.BlockSpec((None, rows, out_lanes), lambda b, t: (b, t, 0)),
        compiler_params=pltpu.CompilerParams(
            dimension_semantics=("parallel", "parallel"),
            vmem_limit_bytes=48 * 1024 * 1024),
    )(seq_p, seq_p, w_top, w_bot, b_cat_p, w_fc_p, b_fc_p)


def mrc_tplinker_ner_forward(params, input_ids, attention_mask, token_type_ids,
                             max_seq_len_t1, visual_field, rows=256):
    # ---- synthetic encoder (plain-JAX glue) -------------------------------
    # TODO(synk): the full transformer encoder (BERT) is not reimplemented; a
    # deterministic embedding + linear + tanh stands in for `self.encoder`.
    emb = params["tok_emb"][input_ids] + params["type_emb"][token_type_ids]
    emb = emb * attention_mask[..., None].astype(emb.dtype)
    last_hidden_state = jnp.tanh(emb @ params["enc_w"] + params["enc_b"])

    seq = last_hidden_state[:, :max_seq_len_t1, :]            # (B, S, H) f32
    B, S, H = seq.shape
    Hp = _round_up(H, 128)
    v_eff = min(visual_field, S)
    n_out = params["w_fc"].shape[1]

    # Row tile (sequence starts per grid step).  Default 256; sweep upward on
    # v5e/v6e (128 MiB VMEM), keep <=512 on v7x (64 MiB VMEM).
    r = min(_round_up(rows, 8), _round_up(S, 8))
    r = max(r, _round_up(max(v_eff - 1, 1), 8))
    vpad = 8                                   # window-tail rows; must divide r
    while vpad < max(v_eff - 1, 1) or r % vpad:
        vpad += 8
    n_tiles = -(-S // r)
    Sp = (n_tiles + 1) * r                     # room for every tile + its tail
    out_lanes = max(128, _round_up(n_out * v_eff, 128))

    # bf16 operands for the MXU; biases and the tanh epilogue stay f32.
    seq_p = jnp.zeros((B, Sp, Hp), jnp.bfloat16).at[:, :S, :H].set(
        seq.astype(jnp.bfloat16))

    w_cat, b_cat = params["w_cat"], params["b_cat"]
    w_fc, b_fc = params["w_fc"], params["b_fc"]
    w_top = jnp.zeros((Hp, Hp), jnp.bfloat16).at[:H, :H].set(
        w_cat[:H].astype(jnp.bfloat16))
    w_bot = jnp.zeros((Hp, Hp), jnp.bfloat16).at[:H, :H].set(
        w_cat[H:].astype(jnp.bfloat16))
    b_cat_p = jnp.zeros((1, Hp), jnp.float32).at[0, :H].set(b_cat)
    w_fc_p = jnp.zeros((Hp, 128), jnp.bfloat16).at[:H, :n_out].set(
        w_fc.astype(jnp.bfloat16))
    b_fc_p = jnp.zeros((1, 128), jnp.float32).at[0, :n_out].set(b_fc)

    dense = handshaking_and_fc(seq_p, w_top, w_bot, b_cat_p, w_fc_p, b_fc_p,
                               v_eff=v_eff, n_out=n_out, rows=r, vpad=vpad,
                               n_tiles=n_tiles, out_lanes=out_lanes)
    # dense[b, i, n_out*d : n_out*(d+1)] = fc(tanh([h_i ; h_{i+d}] W_cat + b))

    # Extract the valid (i, j) pairs in HandshakingKernel order (tiny gather on
    # the compact bf16 output; padded rows/offsets are never read).
    flat_idx = np.asarray(
        [i * v_eff + d for i in range(S) for d in range(min(v_eff, S - i))],
        np.int32)
    out = dense[:, :S, :n_out * v_eff].astype(jnp.float32)
    out = out.reshape(B, S * v_eff, n_out)
    return out[:, flat_idx, :]                                # (B, P, n_out)


def reference_forward(params, input_ids, attention_mask, token_type_ids,
                      max_seq_len_t1, visual_field):
    """Pure-JAX (f32) reference for a correctness sanity check."""
    emb = params["tok_emb"][input_ids] + params["type_emb"][token_type_ids]
    emb = emb * attention_mask[..., None].astype(emb.dtype)
    last_hidden_state = jnp.tanh(emb @ params["enc_w"] + params["enc_b"])
    seq = last_hidden_state[:, :max_seq_len_t1, :]
    start_ids, end_ids = shaking_pair_indices(seq.shape[1], visual_field)
    cat = jnp.concatenate([seq[:, start_ids, :], seq[:, end_ids, :]], axis=-1)
    shaking = jnp.tanh(cat @ params["w_cat"] + params["b_cat"])
    return shaking @ params["w_fc"] + params["b_fc"]


if __name__ == "__main__":
    B, S_total, max_seq_len_t1, H = 2, 10, 8, 32
    vocab, n_types, visual_field = 100, 2, 3

    key = jax.random.PRNGKey(0)
    ks = jax.random.split(key, 8)
    params = {
        "tok_emb":  0.02 * jax.random.normal(ks[0], (vocab, H), jnp.float32),
        "type_emb": 0.02 * jax.random.normal(ks[1], (n_types, H), jnp.float32),
        "enc_w":    0.10 * jax.random.normal(ks[2], (H, H), jnp.float32),
        "enc_b":    jnp.zeros((H,), jnp.float32),
        "w_cat":    0.10 * jax.random.normal(ks[3], (2 * H, H), jnp.float32),
        "b_cat":    0.01 * jax.random.normal(ks[4], (H,), jnp.float32),
        "w_fc":     0.10 * jax.random.normal(ks[5], (H, 2), jnp.float32),
        "b_fc":     jnp.zeros((2,), jnp.float32),
    }

    input_ids = jax.random.randint(ks[6], (B, S_total), 0, vocab, jnp.int32)
    attention_mask = jnp.ones((B, S_total), jnp.int32)
    token_type_ids = jnp.zeros((B, S_total), jnp.int32)

    fwd = functools.partial(mrc_tplinker_ner_forward,
                            max_seq_len_t1=max_seq_len_t1,
                            visual_field=visual_field)
    out = fwd(params, input_ids, attention_mask, token_type_ids)
    jax.block_until_ready(out)

    ref = reference_forward(params, input_ids, attention_mask, token_type_ids,
                            max_seq_len_t1, visual_field)
    assert out.shape == ref.shape == (B, 21, 2), out.shape
    # bf16 matmul datapath vs f32 reference: expected error << 1e-2 here.
    assert jnp.allclose(out, ref, atol=2e-2, rtol=2e-2), "mismatch vs reference"

    print("KERNEL_OK")
</pallas_src>

<mosaic_0001>
module attributes {stable_mosaic.version = 11 : i64} {
  func.func @_handshaking_fc_kernel(%arg0: i32, %arg1: i32, %arg2: memref<1x8x128xbf16, #tpu.memory_space<vmem>>, %arg3: memref<1x8x128xbf16, #tpu.memory_space<vmem>>, %arg4: memref<128x128xbf16, #tpu.memory_space<vmem>>, %arg5: memref<128x128xbf16, #tpu.memory_space<vmem>>, %arg6: memref<1x128xf32, #tpu.memory_space<vmem>>, %arg7: memref<128x128xbf16, #tpu.memory_space<vmem>>, %arg8: memref<1x128xf32, #tpu.memory_space<vmem>>, %arg9: memref<1x8x128xbf16, #tpu.memory_space<vmem>>) attributes {dimension_semantics = [#tpu.dimension_semantics<parallel>, #tpu.dimension_semantics<parallel>], iteration_bounds = array<i64: 2, 1>, scalar_prefetch = 0 : i64, scratch_operands = 0 : i64, tpu.core_type = #tpu.core_type<tc>, window_params = [{transform_indices = @transform_0, window_bounds = array<i64: 1, 8, 128>}, {transform_indices = @transform_1, window_bounds = array<i64: 1, 8, 128>}, {pipeline_mode = #tpu.pipeline_mode<synchronous>, transform_indices = @transform_2, window_bounds = array<i64: 128, 128>}, {pipeline_mode = #tpu.pipeline_mode<synchronous>, transform_indices = @transform_3, window_bounds = array<i64: 128, 128>}, {pipeline_mode = #tpu.pipeline_mode<synchronous>, transform_indices = @transform_4, window_bounds = array<i64: 1, 128>}, {pipeline_mode = #tpu.pipeline_mode<synchronous>, transform_indices = @transform_5, window_bounds = array<i64: 128, 128>}, {pipeline_mode = #tpu.pipeline_mode<synchronous>, transform_indices = @transform_6, window_bounds = array<i64: 1, 128>}, {transform_indices = @transform_7, window_bounds = array<i64: 1, 8, 128>}]} {
    %c0 = arith.constant 0 : index
    %c0_0 = arith.constant 0 : index
    %c0_1 = arith.constant 0 : index
    %0 = vector.load %arg2[%c0, %c0_0, %c0_1] : memref<1x8x128xbf16, #tpu.memory_space<vmem>>, vector<1x8x128xbf16>
    %1 = vector.shape_cast %0 : vector<1x8x128xbf16> to vector<8x128xbf16>
    %c0_2 = arith.constant 0 : index
    %c0_3 = arith.constant 0 : index
    %c0_4 = arith.constant 0 : index
    %2 = vector.load %arg3[%c0_2, %c0_3, %c0_4] : memref<1x8x128xbf16, #tpu.memory_space<vmem>>, vector<1x8x128xbf16>
    %3 = vector.shape_cast %2 : vector<1x8x128xbf16> to vector<8x128xbf16>
    %c0_5 = arith.constant 0 : index
    %c0_6 = arith.constant 0 : index
    %4 = vector.load %arg4[%c0_5, %c0_6] : memref<128x128xbf16, #tpu.memory_space<vmem>>, vector<128x128xbf16>
    %cst = arith.constant dense<0.000000e+00> : vector<8x128xf32>
    %5 = tpu.matmul %1, %4, %cst {dimension_numbers = #tpu.dot_dimension_numbers<[1], [0], [0], [1], [0, 0, 1, 1], [], []>} : vector<8x128xbf16>, vector<128x128xbf16>, vector<8x128xf32> -> vector<8x128xf32>
    %c0_7 = arith.constant 0 : index
    %c0_8 = arith.constant 0 : index
    %6 = vector.load %arg5[%c0_7, %c0_8] : memref<128x128xbf16, #tpu.memory_space<vmem>>, vector<128x128xbf16>
    %cst_9 = arith.constant dense<0.000000e+00> : vector<8x128xf32>
    %7 = tpu.matmul %1, %6, %cst_9 {dimension_numbers = #tpu.dot_dimension_numbers<[1], [0], [0], [1], [0, 0, 1, 1], [], []>} : vector<8x128xbf16>, vector<128x128xbf16>, vector<8x128xf32> -> vector<8x128xf32>
    %c0_10 = arith.constant 0 : index
    %c0_11 = arith.constant 0 : index
    %8 = vector.load %arg5[%c0_10, %c0_11] : memref<128x128xbf16, #tpu.memory_space<vmem>>, vector<128x128xbf16>
    %cst_12 = arith.constant dense<0.000000e+00> : vector<8x128xf32>
    %9 = tpu.matmul %3, %8, %cst_12 {dimension_numbers = #tpu.dot_dimension_numbers<[1], [0], [0], [1], [0, 0, 1, 1], [], []>} : vector<8x128xbf16>, vector<128x128xbf16>, vector<8x128xf32> -> vector<8x128xf32>
    %10 = tpu.concatenate %7, %9 in 0 : vector<8x128xf32>, vector<8x128xf32> -> vector<16x128xf32>
    %c0_13 = arith.constant 0 : index
    %c0_14 = arith.constant 0 : index
    %11 = vector.load %arg6[%c0_13, %c0_14] : memref<1x128xf32, #tpu.memory_space<vmem>>, vector<1x128xf32>
    %c0_15 = arith.constant 0 : index
    %c0_16 = arith.constant 0 : index
    %12 = vector.load %arg7[%c0_15, %c0_16] : memref<128x128xbf16, #tpu.memory_space<vmem>>, vector<128x128xbf16>
    %c0_17 = arith.constant 0 : index
    %c0_18 = arith.constant 0 : index
    %13 = vector.load %arg8[%c0_17, %c0_18] : memref<1x128xf32, #tpu.memory_space<vmem>>, vector<1x128xf32>
    %14 = vector.extract_strided_slice %10 {offsets = [0, 0], sizes = [8, 128], strides = [1, 1]} : vector<16x128xf32> to vector<8x128xf32>
    %15 = arith.addf %5, %14 : vector<8x128xf32>
    %16 = vector.broadcast %11 : vector<1x128xf32> to vector<8x128xf32>
    %17 = arith.addf %15, %16 : vector<8x128xf32>
    %18 = math.tanh %17 : vector<8x128xf32>
    %19 = arith.truncf %18 : vector<8x128xf32> to vector<8x128xbf16>
    %cst_19 = arith.constant dense<0.000000e+00> : vector<8x128xf32>
    %20 = tpu.matmul %19, %12, %cst_19 {dimension_numbers = #tpu.dot_dimension_numbers<[1], [0], [0], [1], [0, 0, 1, 1], [], []>} : vector<8x128xbf16>, vector<128x128xbf16>, vector<8x128xf32> -> vector<8x128xf32>
    %21 = vector.broadcast %13 : vector<1x128xf32> to vector<8x128xf32>
    %22 = arith.addf %20, %21 : vector<8x128xf32>
    %23 = vector.extract_strided_slice %22 {offsets = [0, 0], sizes = [8, 2], strides = [1, 1]} : vector<8x128xf32> to vector<8x2xf32>
    %24 = vector.extract_strided_slice %10 {offsets = [1, 0], sizes = [8, 128], strides = [1, 1]} : vector<16x128xf32> to vector<8x128xf32>
    %25 = arith.addf %5, %24 : vector<8x128xf32>
    %26 = vector.broadcast %11 : vector<1x128xf32> to vector<8x128xf32>
    %27 = arith.addf %25, %26 : vector<8x128xf32>
    %28 = math.tanh %27 : vector<8x128xf32>
    %29 = arith.truncf %28 : vector<8x128xf32> to vector<8x128xbf16>
    %cst_20 = arith.constant dense<0.000000e+00> : vector<8x128xf32>
    %30 = tpu.matmul %29, %12, %cst_20 {dimension_numbers = #tpu.dot_dimension_numbers<[1], [0], [0], [1], [0, 0, 1, 1], [], []>} : vector<8x128xbf16>, vector<128x128xbf16>, vector<8x128xf32> -> vector<8x128xf32>
    %31 = vector.broadcast %13 : vector<1x128xf32> to vector<8x128xf32>
    %32 = arith.addf %30, %31 : vector<8x128xf32>
    %33 = vector.extract_strided_slice %32 {offsets = [0, 0], sizes = [8, 2], strides = [1, 1]} : vector<8x128xf32> to vector<8x2xf32>
    %34 = vector.extract_strided_slice %10 {offsets = [2, 0], sizes = [8, 128], strides = [1, 1]} : vector<16x128xf32> to vector<8x128xf32>
    %35 = arith.addf %5, %34 : vector<8x128xf32>
    %36 = vector.broadcast %11 : vector<1x128xf32> to vector<8x128xf32>
    %37 = arith.addf %35, %36 : vector<8x128xf32>
    %38 = math.tanh %37 : vector<8x128xf32>
    %39 = arith.truncf %38 : vector<8x128xf32> to vector<8x128xbf16>
    %cst_21 = arith.constant dense<0.000000e+00> : vector<8x128xf32>
    %40 = tpu.matmul %39, %12, %cst_21 {dimension_numbers = #tpu.dot_dimension_numbers<[1], [0], [0], [1], [0, 0, 1, 1], [], []>} : vector<8x128xbf16>, vector<128x128xbf16>, vector<8x128xf32> -> vector<8x128xf32>
    %41 = vector.broadcast %13 : vector<1x128xf32> to vector<8x128xf32>
    %42 = arith.addf %40, %41 : vector<8x128xf32>
    %43 = vector.extract_strided_slice %42 {offsets = [0, 0], sizes = [8, 2], strides = [1, 1]} : vector<8x128xf32> to vector<8x2xf32>
    %cst_22 = arith.constant 0.000000e+00 : f32
    %44 = vector.broadcast %cst_22 : f32 to vector<8x122xf32>
    %45 = tpu.concatenate %23, %33, %43, %44 in 1 : vector<8x2xf32>, vector<8x2xf32>, vector<8x2xf32>, vector<8x122xf32> -> vector<8x128xf32>
    %46 = arith.truncf %45 : vector<8x128xf32> to vector<8x128xbf16>
    %c0_23 = arith.constant 0 : index
    %c0_24 = arith.constant 0 : index
    %c0_25 = arith.constant 0 : index
    %47 = vector.load %arg9[%c0_23, %c0_24, %c0_25] : memref<1x8x128xbf16, #tpu.memory_space<vmem>>, vector<1x8x128xbf16>
    %48 = vector.shape_cast %47 : vector<1x8x128xbf16> to vector<8x128xbf16>
    %49 = vector.shape_cast %46 : vector<8x128xbf16> to vector<1x8x128xbf16>
    tpu.vector_store %arg9[%c0_23, %c0_24, %c0_25], %49 {strides = array<i32>} : memref<1x8x128xbf16, #tpu.memory_space<vmem>>, vector<1x8x128xbf16>,
    return
  }
  func.func @transform_0(%arg0: i32, %arg1: i32) -> (i32, i32, i32) {
    %c0_i32 = arith.constant 0 : i32
    %c0_i32_0 = arith.constant 0 : i32
    return %arg0, %arg1, %c0_i32 : i32, i32, i32
  }
  func.func @transform_1(%arg0: i32, %arg1: i32) -> (i32, i32, i32) {
    %c1_i32 = arith.constant 1 : i32
    %0 = arith.addi %arg1, %c1_i32 : i32
    %c1_i32_0 = arith.constant 1 : i32
    %1 = arith.muli %0, %c1_i32_0 : i32
    %c0_i32 = arith.constant 0 : i32
    %c0_i32_1 = arith.constant 0 : i32
    return %arg0, %1, %c0_i32 : i32, i32, i32
  }
  func.func @transform_2(%arg0: i32, %arg1: i32) -> (i32, i32) {
    %c0_i32 = arith.constant 0 : i32
    %c0_i32_0 = arith.constant 0 : i32
    %c0_i32_1 = arith.constant 0 : i32
    return %c0_i32, %c0_i32_0 : i32, i32
  }
  func.func @transform_3(%arg0: i32, %arg1: i32) -> (i32, i32) {
    %c0_i32 = arith.constant 0 : i32
    %c0_i32_0 = arith.constant 0 : i32
    %c0_i32_1 = arith.constant 0 : i32
    return %c0_i32, %c0_i32_0 : i32, i32
  }
  func.func @transform_4(%arg0: i32, %arg1: i32) -> (i32, i32) {
    %c0_i32 = arith.constant 0 : i32
    %c0_i32_0 = arith.constant 0 : i32
    %c0_i32_1 = arith.constant 0 : i32
    return %c0_i32, %c0_i32_0 : i32, i32
  }
  func.func @transform_5(%arg0: i32, %arg1: i32) -> (i32, i32) {
    %c0_i32 = arith.constant 0 : i32
    %c0_i32_0 = arith.constant 0 : i32
    %c0_i32_1 = arith.constant 0 : i32
    return %c0_i32, %c0_i32_0 : i32, i32
  }
  func.func @transform_6(%arg0: i32, %arg1: i32) -> (i32, i32) {
    %c0_i32 = arith.constant 0 : i32
    %c0_i32_0 = arith.constant 0 : i32
    %c0_i32_1 = arith.constant 0 : i32
    return %c0_i32, %c0_i32_0 : i32, i32
  }
  func.func @transform_7(%arg0: i32, %arg1: i32) -> (i32, i32, i32) {
    %c0_i32 = arith.constant 0 : i32
    %c0_i32_0 = arith.constant 0 : i32
    return %arg0, %arg1, %c0_i32 : i32, i32, i32
  }
}

</mosaic_0001>

<llo_original>
// kernel: tpu_custom_call.1
$region0: #{tpu_custom_call.1}
  #allocation0 [shape = 'u32[]', space=smem, size = 0x4, offset = 0x4, fixed_abs, tag = 'smem constant byte address 0x4 - core index']
  #allocation1 [shape = 'u32[72,128]{1,0:T(1,128)}', space=vmem, size = 0x9000, scoped, tag = 'internal scratch']
  %s0 = inlined_call_operand.hbm [shape: bf16[2,16,128], index: 0, kind: input, shape index: {}]
  %s1 = inlined_call_operand.hbm [shape: bf16[2,16,128], index: 1, kind: input, shape index: {}]
  %s2 = inlined_call_operand.hbm [shape: bf16[128,128], index: 2, kind: input, shape index: {}]
  %s3 = inlined_call_operand.hbm [shape: bf16[128,128], index: 3, kind: input, shape index: {}]
  %s4 = inlined_call_operand.vmem [shape: f32[1,128], index: 4, kind: input, shape index: {}]
  %s5 = inlined_call_operand.hbm [shape: bf16[128,128], index: 5, kind: input, shape index: {}]
  %s6 = inlined_call_operand.vmem [shape: f32[1,128], index: 6, kind: input, shape index: {}]
  %s7 = inlined_call_operand.hbm [shape: bf16[2,8,128], index: 7, kind: output, shape index: {}]
  %s8 = sld [smem:[#allocation0]]
  $region81: #{tpu_custom_call.1} parent=0
    _
  %s10 = ssub.s32 1, %s8
  %s11 = scalar_select 0, %s10, %s8
  $region1: #{tpu_custom_call.1} parent=0
    #allocation2 [shape = 'u8[4096]{0}', space=vmem, size = 0x1000, scoped, tag = 'input window, operand 0']
    #allocation3 [shape = 's32[2]{0}', space=sflag, size = 0x8, scoped, tag = 'scoped memory for tpu_custom_call.1']
    #allocation4 [shape = 's32[2]{0}', space=sflag, size = 0x8, scoped, tag = 'scoped memory for tpu_custom_call.1']
    #allocation5 [shape = 'u8[4096]{0}', space=vmem, size = 0x1000, scoped, tag = 'input window, operand 1']
    #allocation6 [shape = 's32[2]{0}', space=sflag, size = 0x8, scoped, tag = 'scoped memory for tpu_custom_call.1']
    #allocation7 [shape = 'u8[32768]{0}', space=vmem, size = 0x8000, scoped, tag = 'input window, operand 2, single buffered']
    #allocation8 [shape = 'u8[32768]{0}', space=vmem, size = 0x8000, scoped, tag = 'input window, operand 3, single buffered']
    #allocation9 [shape = 's32[1]{0}', space=sflag, size = 0x4, scoped, tag = 'scoped memory for tpu_custom_call.1']
    #allocation10 [shape = 'u8[32768]{0}', space=vmem, size = 0x8000, scoped, tag = 'input window, operand 5, single buffered']
    #allocation11 [shape = 'u8[4096]{0}', space=vmem, size = 0x1000, scoped, tag = 'output window, operand 0']
    %12 = vsyncpa [#allocation3], 0
    %s13 = scalar_lea.sflag [#allocation3], 1
    %14 = vsyncpa %s13, 0
    %15 = vsyncpa [#allocation6], 0
    %s16 = scalar_lea.sflag [#allocation6], 1
    %17 = vsyncpa %s16, 0
    %18 = vsyncpa [#allocation9], 0
    %19 = vsyncpa [#allocation4], 0
    %s20 = scalar_lea.sflag [#allocation4], 1
    %21 = vsyncpa %s20, 0
    loop: start=0, step=1, limit=4
    $region2: #{tpu_custom_call.1} parent=1 // loop_pre_header
      _
    $region3: #{tpu_custom_call.1} parent=1 // loop_header
      %s23 = sphi 0, %s27
      %p24 = scmp.ge.s32.totalorder %s23, 4
      %s30 = sphi 0, %s42
      %s31 = sphi 0, %s38
      %s32 = sphi 0, %s30
      %s33 = sphi 0, %s31
      %s34 = sphi 0, %s32
      %s35 = sphi 0, %s33
      %s47 = sphi 0, %s49
      %s50 = sphi 0, %s47
      %s51 = sphi 0, %s50
      %s67 = sphi 0, %s51
      %s77 = sphi 0, %s79
      %s80 = sphi 0, %s77
      %s81 = sphi 0, %s80
      %s97 = sphi 0, %s81
      %s101 = sphi 0, %s101
      %s103 = sphi 0, %s101
      %s104 = sphi 0, %s103
      %s118 = sphi 0, %s104
      %s122 = sphi 0, %s122
      %s124 = sphi 0, %s122
      %s125 = sphi 0, %s124
      %s139 = sphi 0, %s125
      %s143 = sphi 0, %s143
      %s145 = sphi 0, %s143
      %s146 = sphi 0, %s145
      %s160 = sphi 0, %s146
      %s164 = sphi 0, %s164
      %s166 = sphi 0, %s164
      %s167 = sphi 0, %s166
      %s181 = sphi 0, %s167
      %s185 = sphi 0, %s185
      %s187 = sphi 0, %s185
      %s188 = sphi 0, %s187
      %s202 = sphi 0, %s188
      %s210 = sphi 0, %s212
      %s213 = sphi 0, %s210
      %s214 = sphi 0, %s213
      %s230 = sphi 0, %s214
    $region4: #{tpu_custom_call.1} parent=1 // loop_header_branch
      %26 = sbr.rel (%p24) target = $region8
    $region5: #{tpu_custom_call.1} parent=1 // loop_body
      %s28 = ssub.s32 %s23, 1
      %s29 = ssub.s32 %s23, 2
      %s36 = sadd.s32 1, %s31
      %p37 = scmp.ge.s32.totalorder %s36, 1
      %s38 = scalar_select %p37, 0, %s36
      %s39 = sadd.s32 1, %s30
      %s40 = scalar_select %p37, %s39, %s30
      %p41 = scmp.ge.s32.totalorder %s40, 2
      %s42 = scalar_select %p41, 0, %s40
      %s43 = ssub.s32 %s30, %s42
      %s44 = ssub.s32 %s31, %s38
      %s45 = sor.u32 %s43, %s44
      %p46 = scmp.eq.s32.totalorder %s45, 0
      %s48 = sadd.s32 %s47, 1
      %s49 = scalar_select %p46, %s47, %s48
      %p52 = pneg %p46
      %p53 = scmp.eq.s32.totalorder %s23, 1
      %p54 = por %p52, %p53
      %p55 = scmp.ne.s32.totalorder %s47, %s50
      %p56 = scmp.eq.s32.totalorder %s23, 0
      %p57 = por %p55, %p56
      %p58 = scmp.ne.s32.totalorder %s47, %s50
      %p59 = scmp.eq.s32.totalorder %s28, 1
      %p60 = por %p58, %p59
      %p61 = scmp.ne.s32.totalorder %s50, %s51
      %p62 = scmp.eq.s32.totalorder %s28, 0
      %p63 = por %p61, %p62
      %p64 = scmp.ne.s32.totalorder %s50, %s51
      %p65 = scmp.eq.s32.totalorder %s29, 1
      %p66 = por %p64, %p65
      %p68 = scmp.ne.s32.totalorder %s51, %s67
      %p69 = scmp.eq.s32.totalorder %s29, 0
      %p70 = por %p68, %p69
      %s71 = sadd.s32 %s31, 1
      %s72 = sadd.s32 %s38, 1
      %s73 = ssub.s32 %s30, %s42
      %s74 = ssub.s32 %s71, %s72
      %s75 = sor.u32 %s73, %s74
      %p76 = scmp.eq.s32.totalorder %s75, 0
      %s78 = sadd.s32 %s77, 1
      %s79 = scalar_select %p76, %s77, %s78
      %p82 = pneg %p76
      %p83 = scmp.eq.s32.totalorder %s23, 1
      %p84 = por %p82, %p83
      %p85 = scmp.ne.s32.totalorder %s77, %s80
      %p86 = scmp.eq.s32.totalorder %s23, 0
      %p87 = por %p85, %p86
      %p88 = scmp.ne.s32.totalorder %s77, %s80
      %p89 = scmp.eq.s32.totalorder %s28, 1
      %p90 = por %p88, %p89
      %p91 = scmp.ne.s32.totalorder %s80, %s81
      %p92 = scmp.eq.s32.totalorder %s28, 0
      %p93 = por %p91, %p92
      %p94 = scmp.ne.s32.totalorder %s80, %s81
      %p95 = scmp.eq.s32.totalorder %s29, 1
      %p96 = por %p94, %p95
      %p98 = scmp.ne.s32.totalorder %s81, %s97
      %p99 = scmp.eq.s32.totalorder %s29, 0
      %p100 = por %p98, %p99
      %s102 = sadd.s32 %s101, 1
      %p105 = scmp.eq.s32.totalorder %s23, 1
      %p106 = scmp.ne.s32.totalorder %s101, %s103
      %p107 = scmp.eq.s32.totalorder %s23, 0
      %p108 = por %p106, %p107
      %p109 = scmp.ne.s32.totalorder %s101, %s103
      %p110 = scmp.eq.s32.totalorder %s28, 1
      %p111 = por %p109, %p110
      %p112 = scmp.ne.s32.totalorder %s103, %s104
      %p113 = scmp.eq.s32.totalorder %s28, 0
      %p114 = por %p112, %p113
      %p115 = scmp.ne.s32.totalorder %s103, %s104
      %p116 = scmp.eq.s32.totalorder %s29, 1
      %p117 = por %p115, %p116
      %p119 = scmp.ne.s32.totalorder %s104, %s118
      %p120 = scmp.eq.s32.totalorder %s29, 0
      %p121 = por %p119, %p120
      %s123 = sadd.s32 %s122, 1
      %p126 = scmp.eq.s32.totalorder %s23, 1
      %p127 = scmp.ne.s32.totalorder %s122, %s124
      %p128 = scmp.eq.s32.totalorder %s23, 0
      %p129 = por %p127, %p128
      %p130 = scmp.ne.s32.totalorder %s122, %s124
      %p131 = scmp.eq.s32.totalorder %s28, 1
      %p132 = por %p130, %p131
      %p133 = scmp.ne.s32.totalorder %s124, %s125
      %p134 = scmp.eq.s32.totalorder %s28, 0
      %p135 = por %p133, %p134
      %p136 = scmp.ne.s32.totalorder %s124, %s125
      %p137 = scmp.eq.s32.totalorder %s29, 1
      %p138 = por %p136, %p137
      %p140 = scmp.ne.s32.totalorder %s125, %s139
      %p141 = scmp.eq.s32.totalorder %s29, 0
      %p142 = por %p140, %p141
      %s144 = sadd.s32 %s143, 1
      %p147 = scmp.eq.s32.totalorder %s23, 1
      %p148 = scmp.ne.s32.totalorder %s143, %s145
      %p149 = scmp.eq.s32.totalorder %s23, 0
      %p150 = por %p148, %p149
      %p151 = scmp.ne.s32.totalorder %s143, %s145
      %p152 = scmp.eq.s32.totalorder %s28, 1
      %p153 = por %p151, %p152
      %p154 = scmp.ne.s32.totalorder %s145, %s146
      %p155 = scmp.eq.s32.totalorder %s28, 0
      %p156 = por %p154, %p155
      %p157 = scmp.ne.s32.totalorder %s145, %s146
      %p158 = scmp.eq.s32.totalorder %s29, 1
      %p159 = por %p157, %p158
      %p161 = scmp.ne.s32.totalorder %s146, %s160
      %p162 = scmp.eq.s32.totalorder %s29, 0
      %p163 = por %p161, %p162
      %s165 = sadd.s32 %s164, 1
      %p168 = scmp.eq.s32.totalorder %s23, 1
      %p169 = scmp.ne.s32.totalorder %s164, %s166
      %p170 = scmp.eq.s32.totalorder %s23, 0
      %p171 = por %p169, %p170
      %p172 = scmp.ne.s32.totalorder %s164, %s166
      %p173 = scmp.eq.s32.totalorder %s28, 1
      %p174 = por %p172, %p173
      %p175 = scmp.ne.s32.totalorder %s166, %s167
      %p176 = scmp.eq.s32.totalorder %s28, 0
      %p177 = por %p175, %p176
      %p178 = scmp.ne.s32.totalorder %s166, %s167
      %p179 = scmp.eq.s32.totalorder %s29, 1
      %p180 = por %p178, %p179
      %p182 = scmp.ne.s32.totalorder %s167, %s181
      %p183 = scmp.eq.s32.totalorder %s29, 0
      %p184 = por %p182, %p183
      %s186 = sadd.s32 %s185, 1
      %p189 = scmp.eq.s32.totalorder %s23, 1
      %p190 = scmp.ne.s32.totalorder %s185, %s187
      %p191 = scmp.eq.s32.totalorder %s23, 0
      %p192 = por %p190, %p191
      %p193 = scmp.ne.s32.totalorder %s185, %s187
      %p194 = scmp.eq.s32.totalorder %s28, 1
      %p195 = por %p193, %p194
      %p196 = scmp.ne.s32.totalorder %s187, %s188
      %p197 = scmp.eq.s32.totalorder %s28, 0
      %p198 = por %p196, %p197
      %p199 = scmp.ne.s32.totalorder %s187, %s188
      %p200 = scmp.eq.s32.totalorder %s29, 1
      %p201 = por %p199, %p200
      %p203 = scmp.ne.s32.totalorder %s188, %s202
      %p204 = scmp.eq.s32.totalorder %s29, 0
      %p205 = por %p203, %p204
      %s206 = ssub.s32 %s30, %s42
      %s207 = ssub.s32 %s31, %s38
      %s208 = sor.u32 %s206, %s207
      %p209 = scmp.eq.s32.totalorder %s208, 0
      %s211 = sadd.s32 %s210, 1
      %s212 = scalar_select %p209, %s210, %s211
      %p215 = pneg %p209
      %p216 = scmp.eq.s32.totalorder %s23, 1
      %p217 = por %p215, %p216
      %p218 = scmp.ne.s32.totalorder %s210, %s213
      %p219 = scmp.eq.s32.totalorder %s23, 0
      %p220 = por %p218, %p219
      %p221 = scmp.ne.s32.totalorder %s210, %s213
      %p222 = scmp.eq.s32.totalorder %s28, 1
      %p223 = por %p221, %p222
      %p224 = scmp.ne.s32.totalorder %s213, %s214
      %p225 = scmp.eq.s32.totalorder %s28, 0
      %p226 = por %p224, %p225
      %p227 = scmp.ne.s32.totalorder %s213, %s214
      %p228 = scmp.eq.s32.totalorder %s29, 1
      %p229 = por %p227, %p228
      %p231 = scmp.ne.s32.totalorder %s214, %s230
      %p232 = scmp.eq.s32.totalorder %s29, 0
      %p233 = por %p231, %p232
      %p234 = scmp.le.s32.totalorder 1, %s23
      %p235 = scmp.lt.s32.totalorder %s23, 3
      %p236 = pnand %p234, %p235
      %p237 = pneg %p236
      // Predicated region
      $region9: #{tpu_custom_call.1} parent=5 // pred_check
        _
      $region10: #{tpu_custom_call.1} parent=5 // pred_check_branch
        %239 = sbr.rel (%p236) target = $region12
      $region11: #{tpu_custom_call.1} parent=5 // pred_region
        %s240 = ssub.s32 %s23, 1
        // Predicated region
        $region13: #{tpu_custom_call.1} parent=11 // pred_check
          %p241 = pneg %p114
        $region14: #{tpu_custom_call.1} parent=11 // pred_check_branch
          %243 = sbr.rel (%p241) target = $region16
        $region15: #{tpu_custom_call.1} parent=11 // pred_region
          %245 = vsyncadd [#allocation6], 0
          %s246 = sshll.u32 %s2, 4
          %s247 = int_to_ptr.hbm [resolvable:$true] %s246
          %s248 = sshll.u32 [#allocation7], 4
          %s249 = int_to_ptr.vmem [resolvable:$true] %s248
          %254 = dma.hbm_to_vmem [thread:$0]  %s247, 1024, %s249, [#allocation6], 64, 64, 4
        $region16: #{tpu_custom_call.1} parent=11 // pred_fallthru
          _
        // Predicated region
        $region17: #{tpu_custom_call.1} parent=11 // pred_check
          %p255 = pneg %p135
        $region18: #{tpu_custom_call.1} parent=11 // pred_check_branch
          %257 = sbr.rel (%p255) target = $region20
        $region19: #{tpu_custom_call.1} parent=11 // pred_region
          %259 = vsyncadd [#allocation9], 0
          %s260 = sshll.u32 %s3, 4
          %s261 = int_to_ptr.hbm [resolvable:$true] %s260
          %s262 = sshll.u32 [#allocation8], 4
          %s263 = int_to_ptr.vmem [resolvable:$true] %s262
          %268 = dma.hbm_to_vmem [thread:$0]  %s261, 1024, %s263, [#allocation9], 64, 64, 4
        $region20: #{tpu_custom_call.1} parent=11 // pred_fallthru
          _
        // Predicated region
        $region21: #{tpu_custom_call.1} parent=11 // pred_check
          %p269 = pneg %p156
        $region22: #{tpu_custom_call.1} parent=11 // pred_check_branch
          %271 = sbr.rel (%p269) target = $region24
        $region23: #{tpu_custom_call.1} parent=11 // pred_region
          _
        $region24: #{tpu_custom_call.1} parent=11 // pred_fallthru
          _
        // Predicated region
        $region25: #{tpu_custom_call.1} parent=11 // pred_check
          %p272 = pneg %p177
        $region26: #{tpu_custom_call.1} parent=11 // pred_check_branch
          %274 = sbr.rel (%p272) target = $region28
        $region27: #{tpu_custom_call.1} parent=11 // pred_region
          %276 = vsyncadd [#allocation9], 0
          %s277 = sshll.u32 %s5, 4
          %s278 = int_to_ptr.hbm [resolvable:$true] %s277
          %s279 = sshll.u32 [#allocation10], 4
          %s280 = int_to_ptr.vmem [resolvable:$true] %s279
          %285 = dma.hbm_to_vmem [thread:$0]  %s278, 1024, %s280, [#allocation9], 64, 64, 4
        $region28: #{tpu_custom_call.1} parent=11 // pred_fallthru
          _
        // Predicated region
        $region29: #{tpu_custom_call.1} parent=11 // pred_check
          %p286 = pneg %p198
        $region30: #{tpu_custom_call.1} parent=11 // pred_check_branch
          %288 = sbr.rel (%p286) target = $region32
        $region31: #{tpu_custom_call.1} parent=11 // pred_region
          _
        $region32: #{tpu_custom_call.1} parent=11 // pred_fallthru
          _
      $region12: #{tpu_custom_call.1} parent=5 // pred_fallthru
        _
      %p289 = scmp.lt.s32.totalorder %s23, 2
      // Predicated region
      $region33: #{tpu_custom_call.1} parent=5 // pred_check
        %p290 = pneg %p289
      $region34: #{tpu_custom_call.1} parent=5 // pred_check_branch
        %292 = sbr.rel (%p290) target = $region36
      $region35: #{tpu_custom_call.1} parent=5 // pred_region
        // Predicated region
        $region37: #{tpu_custom_call.1} parent=35 // pred_check
          %p293 = pneg %p57
        $region38: #{tpu_custom_call.1} parent=35 // pred_check_branch
          %295 = sbr.rel (%p293) target = $region40
        $region39: #{tpu_custom_call.1} parent=35 // pred_region
          %s296 = sand.u32 %s47, 1
          %s297 = scalar_lea.sflag [#allocation3], %s296
          %s298 = sand.u32 %s47, 1
          %s299 = smul.addr %s298, 4
          %s300 = scalar_lea.vmem [#allocation2], %s299
          %302 = vsyncadd %s297, 0
          %s303 = smul.addr %s30, 2
          %s304 = sadd.s32 %s31, %s303
          %s305 = smul.addr %s304, 4
          %s306 = scalar_lea.hbm %s0, %s305
          %s308 = sshll.u32 %s306, 4
          %s309 = int_to_ptr.hbm [resolvable:$true] %s308
          %s310 = sshll.u32 %s300, 4
          %s311 = int_to_ptr.vmem [resolvable:$true] %s310
          %313 = dma.hbm_to_vmem [thread:$0]  %s309, 64, %s311, %s297
        $region40: #{tpu_custom_call.1} parent=35 // pred_fallthru
          _
        // Predicated region
        $region41: #{tpu_custom_call.1} parent=35 // pred_check
          %p314 = pneg %p87
        $region42: #{tpu_custom_call.1} parent=35 // pred_check_branch
          %316 = sbr.rel (%p314) target = $region44
        $region43: #{tpu_custom_call.1} parent=35 // pred_region
          %s317 = sand.u32 %s23, 1
          %s318 = scalar_lea.sflag [#allocation6], %s317
          %s319 = sand.u32 %s77, 1
          %s320 = smul.addr %s319, 4
          %s321 = scalar_lea.vmem [#allocation5], %s320
          %s322 = sadd.s32 %s31, 1
          %324 = vsyncadd %s318, 0
          %s325 = smul.addr %s30, 2
          %s326 = sadd.s32 %s322, %s325
          %s327 = smul.addr %s326, 4
          %s328 = scalar_lea.hbm %s1, %s327
          %s330 = sshll.u32 %s328, 4
          %s331 = int_to_ptr.hbm [resolvable:$true] %s330
          %s332 = sshll.u32 %s321, 4
          %s333 = int_to_ptr.vmem [resolvable:$true] %s332
          %335 = dma.hbm_to_vmem [thread:$0]  %s331, 64, %s333, %s318
        $region44: #{tpu_custom_call.1} parent=35 // pred_fallthru
          _
      $region36: #{tpu_custom_call.1} parent=5 // pred_fallthru
        _
      %p336 = scmp.le.s32.totalorder 1, %s23
      %p337 = scmp.lt.s32.totalorder %s23, 3
      %p338 = pnand %p336, %p337
      %p339 = pneg %p338
      // Predicated region
      $region45: #{tpu_custom_call.1} parent=5 // pred_check
        _
      $region46: #{tpu_custom_call.1} parent=5 // pred_check_branch
        %341 = sbr.rel (%p338) target = $region48
      $region47: #{tpu_custom_call.1} parent=5 // pred_region
        %s342 = ssub.s32 %s23, 1
        %s343 = sand.u32 %s50, 1
        %s344 = scalar_lea.sflag [#allocation3], %s343
        %s345 = sand.u32 %s50, 1
        %s346 = smul.addr %s345, 4
        %s347 = scalar_lea.vmem [#allocation2], %s346
        // Predicated region
        $region49: #{tpu_custom_call.1} parent=47 // pred_check
          %p348 = pneg %p63
        $region50: #{tpu_custom_call.1} parent=47 // pred_check_branch
          %350 = sbr.rel (%p348) target = $region52
        $region51: #{tpu_custom_call.1} parent=47 // pred_region
          %352 = dma.done %s344, 64
        $region52: #{tpu_custom_call.1} parent=47 // pred_fallthru
          _
        %s353 = sand.u32 %s28, 1
        %s354 = scalar_lea.sflag [#allocation6], %s353
        %s355 = sand.u32 %s80, 1
        %s356 = smul.addr %s355, 4
        %s357 = scalar_lea.vmem [#allocation5], %s356
        // Predicated region
        $region53: #{tpu_custom_call.1} parent=47 // pred_check
          %p358 = pneg %p93
        $region54: #{tpu_custom_call.1} parent=47 // pred_check_branch
          %360 = sbr.rel (%p358) target = $region56
        $region55: #{tpu_custom_call.1} parent=47 // pred_region
          %362 = dma.done %s354, 64
        $region56: #{tpu_custom_call.1} parent=47 // pred_fallthru
          _
        // Predicated region
        $region57: #{tpu_custom_call.1} parent=47 // pred_check
          %p363 = pneg %p114
        $region58: #{tpu_custom_call.1} parent=47 // pred_check_branch
          %365 = sbr.rel (%p363) target = $region60
        $region59: #{tpu_custom_call.1} parent=47 // pred_region
          %367 = dma.done [#allocation6], 1024
        $region60: #{tpu_custom_call.1} parent=47 // pred_fallthru
          _
        // Predicated region
        $region61: #{tpu_custom_call.1} parent=47 // pred_check
          %p368 = pneg %p135
        $region62: #{tpu_custom_call.1} parent=47 // pred_check_branch
          %370 = sbr.rel (%p368) target = $region64
        $region63: #{tpu_custom_call.1} parent=47 // pred_region
          %372 = dma.done [#allocation9], 1024
        $region64: #{tpu_custom_call.1} parent=47 // pred_fallthru
          _
        // Predicated region
        $region65: #{tpu_custom_call.1} parent=47 // pred_check
          %p373 = pneg %p177
        $region66: #{tpu_custom_call.1} parent=47 // pred_check_branch
          %375 = sbr.rel (%p373) target = $region68
        $region67: #{tpu_custom_call.1} parent=47 // pred_region
          %377 = dma.done [#allocation9], 1024
        $region68: #{tpu_custom_call.1} parent=47 // pred_fallthru
          _
        %s378 = sand.u32 %s50, 1
        %s379 = scalar_lea.sflag [#allocation3], %s378
        %s380 = sand.u32 %s50, 1
        %s381 = smul.addr %s380, 4
        %s382 = scalar_lea.vmem [#allocation2], %s381
        %p383 = pneg %p63
        %p384 = pneg %p60
        %s385 = sand.u32 %s28, 1
        %s386 = scalar_lea.sflag [#allocation6], %s385
        %s387 = sand.u32 %s80, 1
        %s388 = smul.addr %s387, 4
        %s389 = scalar_lea.vmem [#allocation5], %s388
        %p390 = pneg %p93
        %p391 = pneg %p90
        %p392 = pneg %p114
        %p393 = pneg %p111
        %p394 = pneg %p135
        %p395 = pneg %p132
        %p396 = pneg %p156
        %p397 = pneg %p153
        %p398 = pneg %p177
        %p399 = pneg %p174
        %p400 = pneg %p198
        %p401 = pneg %p195
        %p402 = pneg %p226
        %p403 = pneg %p223
        %s404 = sand.u32 %s213, 1
        %s405 = scalar_lea.sflag [#allocation4], %s404
        %s406 = sand.u32 %s213, 1
        %s407 = smul.addr %s406, 4
        %s408 = scalar_lea.vmem [#allocation11], %s407
        %s409 = sadd.s32 %s33, 1
        %v410 = vld [vmem:[%s347] sm:$0xf]
        %v411 = vld [vmem:[%s357] sm:$0xf]
        %v412 = vld [vmem:[#allocation7] sm:$0xf]
        %v413 = vld [vmem:[#allocation7 + $0x4] sm:$0xf]
        %v414 = vld [vmem:[#allocation7 + $0x8] sm:$0xf]
        %v415 = vld [vmem:[#allocation7 + $0xc] sm:$0xf]
        %v416 = vld [vmem:[#allocation7 + $0x10] sm:$0xf]
        %v417 = vld [vmem:[#allocation7 + $0x14] sm:$0xf]
        %v418 = vld [vmem:[#allocation7 + $0x18] sm:$0xf]
        %v419 = vld [vmem:[#allocation7 + $0x1c] sm:$0xf]
        %v420 = vld [vmem:[#allocation7 + $0x20] sm:$0xf]
        %v421 = vld [vmem:[#allocation7 + $0x24] sm:$0xf]
        %v422 = vld [vmem:[#allocation7 + $0x28] sm:$0xf]
        %v423 = vld [vmem:[#allocation7 + $0x2c] sm:$0xf]
        %v424 = vld [vmem:[#allocation7 + $0x30] sm:$0xf]
        %v425 = vld [vmem:[#allocation7 + $0x34] sm:$0xf]
        %v426 = vld [vmem:[#allocation7 + $0x38] sm:$0xf]
        %v427 = vld [vmem:[#allocation7 + $0x3c] sm:$0xf]
        %v444 = vunpack.c.l.b16 %v412
        %v445 = vunpack.c.l.b16 %v413
        %v446 = vunpack.c.l.b16 %v414
        %v447 = vunpack.c.l.b16 %v415
        %v448 = vunpack.c.l.b16 %v416
        %v449 = vunpack.c.l.b16 %v417
        %v450 = vunpack.c.l.b16 %v418
        %v451 = vunpack.c.l.b16 %v419
        %v452 = vunpack.c.l.b16 %v420
        %v453 = vunpack.c.l.b16 %v421
        %v454 = vunpack.c.l.b16 %v422
        %v455 = vunpack.c.l.b16 %v423
        %v456 = vunpack.c.l.b16 %v424
        %v457 = vunpack.c.l.b16 %v425
        %v458 = vunpack.c.l.b16 %v426
        %v459 = vunpack.c.l.b16 %v427
        %v460 = vpack.c.b16 %v445, %v444
        %v461 = vpack.c.b16 %v447, %v446
        %v462 = vpack.c.b16 %v449, %v448
        %v463 = vpack.c.b16 %v451, %v450
        %v464 = vpack.c.b16 %v453, %v452
        %v465 = vpack.c.b16 %v455, %v454
        %v466 = vpack.c.b16 %v457, %v456
        %v467 = vpack.c.b16 %v459, %v458
        %476 = vmatpush.bf16.msra.mxu0 %v467
        %477 = vmatpush.bf16.msra.mxu0 %v466
        %478 = vmatpush.bf16.msra.mxu0 %v465
        %479 = vmatpush.bf16.msra.mxu0 %v464
        %480 = vmatpush.bf16.msra.mxu0 %v463
        %481 = vmatpush.bf16.msra.mxu0 %v462
        %482 = vmatpush.bf16.msra.mxu0 %v461
        %483 = vmatpush.bf16.msra.mxu0 %v460
        %484 = vmatmul.bf16.gmra.mxu0 %v410
        %v485 = vpop.f32.mrf.mxu0
        %v486 = vadd.f32 0.0, %v485
        %v487 = vpop.f32.mrf.mxu0
        %488 = vdwg.mxu0
        %v489 = vld [vmem:[#allocation8] sm:$0xf]
        %v490 = vld [vmem:[#allocation8 + $0x4] sm:$0xf]
        %v491 = vld [vmem:[#allocation8 + $0x8] sm:$0xf]
        %v492 = vld [vmem:[#allocation8 + $0xc] sm:$0xf]
        %v493 = vld [vmem:[#allocation8 + $0x10] sm:$0xf]
        %v494 = vld [vmem:[#allocation8 + $0x14] sm:$0xf]
        %v495 = vld [vmem:[#allocation8 + $0x18] sm:$0xf]
        %v496 = vld [vmem:[#allocation8 + $0x1c] sm:$0xf]
        %v497 = vld [vmem:[#allocation8 + $0x20] sm:$0xf]
        %v498 = vld [vmem:[#allocation8 + $0x24] sm:$0xf]
        %v499 = vld [vmem:[#allocation8 + $0x28] sm:$0xf]
        %v500 = vld [vmem:[#allocation8 + $0x2c] sm:$0xf]
        %v501 = vld [vmem:[#allocation8 + $0x30] sm:$0xf]
        %v502 = vld [vmem:[#allocation8 + $0x34] sm:$0xf]
        %v503 = vld [vmem:[#allocation8 + $0x38] sm:$0xf]
        %v504 = vld [vmem:[#allocation8 + $0x3c] sm:$0xf]
        %v521 = vunpack.c.l.b16 %v489
        %v522 = vunpack.c.l.b16 %v490
        %v523 = vunpack.c.l.b16 %v491
        %v524 = vunpack.c.l.b16 %v492
        %v525 = vunpack.c.l.b16 %v493
        %v526 = vunpack.c.l.b16 %v494
        %v527 = vunpack.c.l.b16 %v495
        %v528 = vunpack.c.l.b16 %v496
        %v529 = vunpack.c.l.b16 %v497
        %v530 = vunpack.c.l.b16 %v498
        %v531 = vunpack.c.l.b16 %v499
        %v532 = vunpack.c.l.b16 %v500
        %v533 = vunpack.c.l.b16 %v501
        %v534 = vunpack.c.l.b16 %v502
        %v535 = vunpack.c.l.b16 %v503
        %v536 = vunpack.c.l.b16 %v504
        %v537 = vpack.c.b16 %v522, %v521
        %v538 = vpack.c.b16 %v524, %v523
        %v539 = vpack.c.b16 %v526, %v525
        %v540 = vpack.c.b16 %v528, %v527
        %v541 = vpack.c.b16 %v530, %v529
        %v542 = vpack.c.b16 %v532, %v531
        %v543 = vpack.c.b16 %v534, %v533
        %v544 = vpack.c.b16 %v536, %v535
        %553 = vmatpush.bf16.msra.mxu0 %v544
        %554 = vmatpush.bf16.msra.mxu0 %v543
        %555 = vmatpush.bf16.msra.mxu0 %v542
        %556 = vmatpush.bf16.msra.mxu0 %v541
        %557 = vmatpush.bf16.msra.mxu0 %v540
        %558 = vmatpush.bf16.msra.mxu0 %v539
        %559 = vmatpush.bf16.msra.mxu0 %v538
        %560 = vmatpush.bf16.msra.mxu0 %v537
        %561 = vmatmul.bf16.gmra.mxu0 %v410
        %v562 = vpop.f32.mrf.mxu0
        %v563 = vadd.f32 0.0, %v562
        %v564 = vpop.f32.mrf.mxu0
        %565 = vdwg.mxu0
        %566 = vmatpush.bf16.msra.mxu0 %v544
        %567 = vmatpush.bf16.msra.mxu0 %v543
        %568 = vmatpush.bf16.msra.mxu0 %v542
        %569 = vmatpush.bf16.msra.mxu0 %v541
        %570 = vmatpush.bf16.msra.mxu0 %v540
        %571 = vmatpush.bf16.msra.mxu0 %v539
        %572 = vmatpush.bf16.msra.mxu0 %v538
        %573 = vmatpush.bf16.msra.mxu0 %v537
        %574 = vmatmul.bf16.gmra.mxu0 %v411
        %v575 = vpop.f32.mrf.mxu0
        %v576 = vadd.f32 0.0, %v575
        %v577 = vpop.f32.mrf.mxu0
        %578 = vdwg.mxu0
        %v579 = vld [vmem:[%s4] sm:$0x1]
        %v580 = vld [vmem:[#allocation10] sm:$0xf]
        %v581 = vld [vmem:[#allocation10 + $0x4] sm:$0xf]
        %v582 = vld [vmem:[#allocation10 + $0x8] sm:$0xf]
        %v583 = vld [vmem:[#allocation10 + $0xc] sm:$0xf]
        %v584 = vld [vmem:[#allocation10 + $0x10] sm:$0xf]
        %v585 = vld [vmem:[#allocation10 + $0x14] sm:$0xf]
        %v586 = vld [vmem:[#allocation10 + $0x18] sm:$0xf]
        %v587 = vld [vmem:[#allocation10 + $0x1c] sm:$0xf]
        %v588 = vld [vmem:[#allocation10 + $0x20] sm:$0xf]
        %v589 = vld [vmem:[#allocation10 + $0x24] sm:$0xf]
        %v590 = vld [vmem:[#allocation10 + $0x28] sm:$0xf]
        %v591 = vld [vmem:[#allocation10 + $0x2c] sm:$0xf]
        %v592 = vld [vmem:[#allocation10 + $0x30] sm:$0xf]
        %v593 = vld [vmem:[#allocation10 + $0x34] sm:$0xf]
        %v594 = vld [vmem:[#allocation10 + $0x38] sm:$0xf]
        %v595 = vld [vmem:[#allocation10 + $0x3c] sm:$0xf]
        %v596 = vld [vmem:[%s6] sm:$0x1]
        %v597 = vadd.f32 %v486, %v563
        %v599 = vperm.slane %v579, 0
        %v601 = vadd.f32 %v597, %v599
        %v602 = vtanh.pop %v601
        %v603 = vpack.c.bf16 %v602, %v602
        %v605 = vperm.slane %v596, 0
        %v623 = vunpack.c.l.b16 %v580
        %v624 = vunpack.c.l.b16 %v581
        %v625 = vunpack.c.l.b16 %v582
        %v626 = vunpack.c.l.b16 %v583
        %v627 = vunpack.c.l.b16 %v584
        %v628 = vunpack.c.l.b16 %v585
        %v629 = vunpack.c.l.b16 %v586
        %v630 = vunpack.c.l.b16 %v587
        %v631 = vunpack.c.l.b16 %v588
        %v632 = vunpack.c.l.b16 %v589
        %v633 = vunpack.c.l.b16 %v590
        %v634 = vunpack.c.l.b16 %v591
        %v635 = vunpack.c.l.b16 %v592
        %v636 = vunpack.c.l.b16 %v593
        %v637 = vunpack.c.l.b16 %v594
        %v638 = vunpack.c.l.b16 %v595
        %v639 = vpack.c.b16 %v624, %v623
        %v640 = vpack.c.b16 %v626, %v625
        %v641 = vpack.c.b16 %v628, %v627
        %v642 = vpack.c.b16 %v630, %v629
        %v643 = vpack.c.b16 %v632, %v631
        %v644 = vpack.c.b16 %v634, %v633
        %v645 = vpack.c.b16 %v636, %v635
        %v646 = vpack.c.b16 %v638, %v637
        %655 = vmatpush.bf16.msra.mxu0 %v646
        %656 = vmatpush.bf16.msra.mxu0 %v645
        %657 = vmatpush.bf16.msra.mxu0 %v644
        %658 = vmatpush.bf16.msra.mxu0 %v643
        %659 = vmatpush.bf16.msra.mxu0 %v642
        %660 = vmatpush.bf16.msra.mxu0 %v641
        %661 = vmatpush.bf16.msra.mxu0 %v640
        %662 = vmatpush.bf16.msra.mxu0 %v639
        %663 = vmatmul.bf16.gmra.mxu0 %v603
        %v664 = vpop.f32.mrf.mxu0
        %v665 = vadd.f32 %v605, %v664
        %v666 = vpop.f32.mrf.mxu0
        %667 = vdwg.mxu0
        %vm670 = vcmask 1046528
        %v671 = vrot.slane %v563, 1
        %v672 = vrot.slane %v576, 1
        %v673 = vsel %vm670, %v671, %v672
        %v675 = vadd.f32 %v486, %v673
        %v676 = vadd.f32 %v675, %v599
        %v677 = vtanh.pop %v676
        %v678 = vpack.c.bf16 %v677, %v677
        %679 = vmatpush.bf16.msra.mxu0 %v646
        %680 = vmatpush.bf16.msra.mxu0 %v645
        %681 = vmatpush.bf16.msra.mxu0 %v644
        %682 = vmatpush.bf16.msra.mxu0 %v643
        %683 = vmatpush.bf16.msra.mxu0 %v642
        %684 = vmatpush.bf16.msra.mxu0 %v641
        %685 = vmatpush.bf16.msra.mxu0 %v640
        %686 = vmatpush.bf16.msra.mxu0 %v639
        %687 = vmatmul.bf16.gmra.mxu0 %v678
        %v688 = vpop.f32.mrf.mxu0
        %v689 = vadd.f32 %v605, %v688
        %v690 = vpop.f32.mrf.mxu0
        %691 = vdwg.mxu0
        %vm692 = vcmask 1045504
        %v693 = vrot.slane %v563, 2
        %v694 = vrot.slane %v576, 2
        %v695 = vsel %vm692, %v693, %v694
        %v697 = vadd.f32 %v486, %v695
        %v698 = vadd.f32 %v697, %v599
        %v699 = vtanh.pop %v698
        %v700 = vpack.c.bf16 %v699, %v699
        %701 = vmatpush.bf16.msra.mxu0 %v646
        %702 = vmatpush.bf16.msra.mxu0 %v645
        %703 = vmatpush.bf16.msra.mxu0 %v644
        %704 = vmatpush.bf16.msra.mxu0 %v643
        %705 = vmatpush.bf16.msra.mxu0 %v642
        %706 = vmatpush.bf16.msra.mxu0 %v641
        %707 = vmatpush.bf16.msra.mxu0 %v640
        %708 = vmatpush.bf16.msra.mxu0 %v639
        %709 = vmatmul.bf16.gmra.mxu0 %v700
        %v710 = vpop.f32.mrf.mxu0
        %v711 = vadd.f32 %v605, %v710
        %v712 = vpop.f32.mrf.mxu0
        %713 = vdwg.mxu0
        %715 = vrot.lane.b32.xlu0 %v689, 2
        %v716 = vpop.permute.xlu0 %715
        %719 = vrot.lane.b32.xlu0 %v711, 4
        %v720 = vpop.permute.xlu0 %719
        %vm722 = vcmask 15360
        %v723 = vsel %vm722, %v665, %v716
        %vm724 = vcmask 31744
        %v725 = vsel %vm724, %v723, %v720
        %vm726 = vcmask 48128
        %v727 = vsel %vm726, %v725, 0.0
        %v728 = vpack.c.bf16 %v727, %v727
        %729 = vst [vmem:[%s408] sm:$0xf] %v728
        %s730 = sand.u32 %s213, 1
        %s731 = scalar_lea.sflag [#allocation4], %s730
        %s732 = sand.u32 %s213, 1
        %s733 = smul.addr %s732, 4
        %s734 = scalar_lea.vmem [#allocation11], %s733
        // Predicated region
        $region69: #{tpu_custom_call.1} parent=47 // pred_check
          %p735 = pneg %p223
        $region70: #{tpu_custom_call.1} parent=47 // pred_check_branch
          %737 = sbr.rel (%p735) target = $region72
        $region71: #{tpu_custom_call.1} parent=47 // pred_region
          %739 = vsyncadd %s731, 0
          %s740 = sadd.s32 %s33, %s32
          %s741 = smul.addr %s740, 4
          %s742 = scalar_lea.hbm %s7, %s741
          %s744 = sshll.u32 %s734, 4
          %s745 = int_to_ptr.vmem [resolvable:$true] %s744
          %s746 = sshll.u32 %s742, 4
          %s747 = int_to_ptr.hbm [resolvable:$true] %s746
          %749 = dma.vmem_to_hbm [thread:$0]  %s745, 64, %s747, %s731
        $region72: #{tpu_custom_call.1} parent=47 // pred_fallthru
          _
      $region48: #{tpu_custom_call.1} parent=5 // pred_fallthru
        _
      %p750 = scmp.le.s32.totalorder 2, %s23
      // Predicated region
      $region73: #{tpu_custom_call.1} parent=5 // pred_check
        %p751 = pneg %p750
      $region74: #{tpu_custom_call.1} parent=5 // pred_check_branch
        %753 = sbr.rel (%p751) target = $region76
      $region75: #{tpu_custom_call.1} parent=5 // pred_region
        %s754 = ssub.s32 %s23, 2
        // Predicated region
        $region77: #{tpu_custom_call.1} parent=75 // pred_check
          %p755 = pneg %p229
        $region78: #{tpu_custom_call.1} parent=75 // pred_check_branch
          %757 = sbr.rel (%p755) target = $region80
        $region79: #{tpu_custom_call.1} parent=75 // pred_region
          %s758 = sand.u32 %s214, 1
          %s759 = scalar_lea.sflag [#allocation4], %s758
          %s760 = sand.u32 %s214, 1
          %s761 = smul.addr %s760, 4
          %s762 = scalar_lea.vmem [#allocation11], %s761
          %764 = dma.done %s759, 64
        $region80: #{tpu_custom_call.1} parent=75 // pred_fallthru
          _
      $region76: #{tpu_custom_call.1} parent=5 // pred_fallthru
        _
    $region6: #{tpu_custom_call.1} parent=1 // loop_footer
      %s27 = sadd.s32 1, %s23
    $region7: #{tpu_custom_call.1} parent=1 // loop_footer_branch
      %22 = sbr.rel target = $region3
    $region8: #{tpu_custom_call.1} parent=1 // loop_exit
      _
    %765 = vsyncpa [#allocation3], 1
    %s766 = scalar_lea.sflag [#allocation3], 1
    %767 = vsyncpa %s766, 1
    %768 = vsyncpa [#allocation6], 1
    %s769 = scalar_lea.sflag [#allocation6], 1
    %770 = vsyncpa %s769, 1
    %771 = vsyncpa [#allocation9], 1
    %772 = vsyncpa [#allocation4], 1
    %s773 = scalar_lea.sflag [#allocation4], 1
    %774 = vsyncpa %s773, 1

</llo_original>
